<compile_context>
chip_gen: v5e
topology: v5e:2x2
jax: 0.10.0
libtpu: 0.0.40
codegen_flags: <defaults>
</compile_context>

<pallas_src>
import functools

import jax
import jax.numpy as jnp
from jax.experimental import pallas as pl
from jax.experimental.pallas import tpu as pltpu


# ----------------------------------------------------------------------------- kernel
def _conv3x3_fused_kernel(*refs, stride, th, wo, cin, add_residual, apply_relu):
    """One output-row tile: im2col slab -> single MXU matmul -> f32 epilogue."""
    if add_residual:
        xph_ref, w_ref, scale_ref, bias_ref, res_ref, out_ref = refs
    else:
        xph_ref, w_ref, scale_ref, bias_ref, out_ref = refs
        res_ref = None

    r = pl.program_id(1)
    row0 = r * th                                  # first OUTPUT row of this tile

    # Build the tap-concatenated im2col slab.  Each tap (kh, kw) is a contiguous
    # window of one polyphase component of the padded input (phase = stride
    # residues of kh, kw), so every load is a plain dynamic-start slice.
    taps = []
    for kh in range(3):
        for kw in range(3):
            phase = (kh % stride) * stride + (kw % stride)
            roff, coff = kh // stride, kw // stride
            win = xph_ref[phase, pl.ds(row0 + roff, th), pl.ds(coff, wo), :]
            taps.append(win)                       # (th, wo, cin) f32
    slab = jnp.concatenate(taps, axis=-1)          # (th, wo, 9*cin)
    slab = slab.reshape(th * wo, 9 * cin)          # (rows, K)

    # bf16 operands into the MXU, f32 accumulation.
    acc = jnp.dot(slab.astype(w_ref.dtype), w_ref[...],
                  preferred_element_type=jnp.float32)      # (rows, Cout_padded)

    # f32 epilogue: folded-BN affine (+ residual) (+ ReLU), lane-dense store.
    y = acc * scale_ref[...] + bias_ref[...]
    if add_residual:
        y = y + res_ref[0].astype(jnp.float32)
    if apply_relu:
        y = jnp.maximum(y, 0.0)
    out_ref[0] = y.astype(out_ref.dtype)


# ----------------------------------------------------------------------------- helpers
def _round_up(x, m):
    return (x + m - 1) // m * m


def _pick_row_tile(ho, wo, target_rows=128):
    """Largest output-row tile TH dividing Ho with TH*Wo <= target_rows and a
    sublane-aligned (multiple-of-8) row count; falls back to the full extent.
    target_rows is sized for the demo shapes; scale it up toward the VMEM budget
    for real feature maps."""
    best, found = ho, False
    for th in range(1, ho + 1):
        if ho % th:
            continue
        rows = th * wo
        if rows <= target_rows and (rows % 8 == 0 or th == ho):
            best, found = th, True
    return best if found else ho


# ----------------------------------------------------------------------------- wrapper
def conv3x3_bn_act(x_nhwc, w_hwio, scale, bias, *, stride=1, residual=None,
                   relu=True, mxu_dtype=jnp.bfloat16):
    """Fused 3x3 conv (pad=1) + per-channel affine (+residual)(+ReLU).

    x_nhwc: (N,H,W,Cin); w_hwio: (3,3,Cin,Cout); scale/bias: (Cout,).
    residual (optional): (N,Ho,Wo,Cout), added before the ReLU.
    Returns (N,Ho,Wo,Cout) in x's dtype.
    """
    N, H, W, Cin = x_nhwc.shape
    Cout = w_hwio.shape[-1]
    Ho = (H - 1) // stride + 1
    Wo = (W - 1) // stride + 1
    Cout_p = _round_up(Cout, 128)                  # lane-dense output channels

    # 1-px zero halo (glue, outside the kernel).
    xpad = jnp.pad(x_nhwc.astype(jnp.float32), ((0, 0), (1, 1), (1, 1), (0, 0)))
    Hp, Wp = H + 2, W + 2

    # Polyphase decomposition of the padded input for stride handling.
    # stride==1 -> a single phase == xpad itself.
    s = stride
    s2 = s * s
    Hph = -(-Hp // s)
    Wph = -(-Wp // s)
    phases = []
    for ph in range(s):
        for pw in range(s):
            a = xpad[:, ph::s, pw::s, :]
            a = jnp.pad(a, ((0, 0), (0, Hph - a.shape[1]),
                            (0, Wph - a.shape[2]), (0, 0)))
            phases.append(a)
    # (N, s2, Hph, Wph, Cin) -> (N*s2, Hph, Wph, Cin): batch-major, phase-minor.
    xph = jnp.stack(phases, axis=1).reshape(N * s2, Hph, Wph, Cin)

    # HWIO -> (9*Cin, Cout_p): tap-major weight slab, channel-padded, bf16 for the MXU.
    w_k = jnp.pad(w_hwio.reshape(9 * Cin, Cout),
                  ((0, 0), (0, Cout_p - Cout))).astype(mxu_dtype)
    scale_k = jnp.pad(scale.reshape(1, Cout).astype(jnp.float32),
                      ((0, 0), (0, Cout_p - Cout)))
    bias_k = jnp.pad(bias.reshape(1, Cout).astype(jnp.float32),
                     ((0, 0), (0, Cout_p - Cout)))

    add_residual = residual is not None
    inputs = [xph, w_k, scale_k, bias_k]
    if add_residual:
        assert residual.shape == (N, Ho, Wo, Cout)
        res_k = jnp.pad(residual.astype(jnp.float32).reshape(N, Ho * Wo, Cout),
                        ((0, 0), (0, 0), (0, Cout_p - Cout)))
        inputs.append(res_k)

    TH = _pick_row_tile(Ho, Wo)                    # output rows per grid step
    RT = Ho // TH
    R = TH * Wo                                    # matmul M-dim per step

    in_specs = [
        # All phases of this batch element; block index only depends on n, so the
        # block is DMA'd once per batch element and reused across its row tiles.
        pl.BlockSpec((s2, Hph, Wph, Cin), lambda n, r: (n, 0, 0, 0)),
        pl.BlockSpec((9 * Cin, Cout_p), lambda n, r: (0, 0)),
        pl.BlockSpec((1, Cout_p), lambda n, r: (0, 0)),
        pl.BlockSpec((1, Cout_p), lambda n, r: (0, 0)),
    ]
    if add_residual:
        in_specs.append(pl.BlockSpec((1, R, Cout_p), lambda n, r: (n, r, 0)))

    out = pl.pallas_call(
        functools.partial(_conv3x3_fused_kernel, stride=stride, th=TH, wo=Wo,
                          cin=Cin, add_residual=add_residual, apply_relu=relu),
        grid=(N, RT),
        in_specs=in_specs,
        out_specs=pl.BlockSpec((1, R, Cout_p), lambda n, r: (n, r, 0)),
        out_shape=jax.ShapeDtypeStruct((N, Ho * Wo, Cout_p), x_nhwc.dtype),
        compiler_params=pltpu.CompilerParams(
            dimension_semantics=("parallel", "parallel"),
            vmem_limit_bytes=64 * 1024 * 1024),
    )(*inputs)

    # Layout plumbing back to NHWC and drop the channel padding (outside the kernel).
    return out.reshape(N, Ho, Wo, Cout_p)[..., :Cout]


def residual_block(x_nchw, params, *, use_1x1conv=False, strides=1, eps=1e-5):
    """Forward of the PyTorch `Residual` module. Input/output are NCHW."""
    x = jnp.transpose(x_nchw, (0, 2, 3, 1))                       # NCHW -> NHWC

    def fold_bn(conv_b, gamma, beta, mean, var):
        s = gamma / jnp.sqrt(var + eps)
        return s, beta + s * (conv_b - mean)

    w1 = jnp.transpose(params["w1"], (2, 3, 1, 0))                # OIHW -> HWIO
    w2 = jnp.transpose(params["w2"], (2, 3, 1, 0))
    s1, b1 = fold_bn(params["b1"], params["gamma1"], params["beta1"],
                     params["mean1"], params["var1"])
    s2, b2 = fold_bn(params["b2"], params["gamma2"], params["beta2"],
                     params["mean2"], params["var2"])

    # y = relu(bn1(conv1(x)))
    y = conv3x3_bn_act(x, w1, s1, b1, stride=strides, relu=True)

    # shortcut: conv3(x) (note: kernel_size=3 in this module, despite the flag name)
    if use_1x1conv:
        w3 = jnp.transpose(params["w3"], (2, 3, 1, 0))
        shortcut = conv3x3_bn_act(x, w3, jnp.ones_like(params["b3"]), params["b3"],
                                  stride=strides, relu=False)
    else:
        shortcut = x

    # y = relu(bn2(conv2(y)) + shortcut)   (residual add + relu fused in the kernel)
    y = conv3x3_bn_act(y, w2, s2, b2, stride=1, residual=shortcut, relu=True)
    return jnp.transpose(y, (0, 3, 1, 2))                         # NHWC -> NCHW


# ----------------------------------------------------------------------------- reference
def residual_block_ref(x, p, *, use_1x1conv=False, strides=1, eps=1e-5):
    def conv(x, w, b, s):
        y = jax.lax.conv_general_dilated(
            x, w, (s, s), ((1, 1), (1, 1)),
            dimension_numbers=("NCHW", "OIHW", "NCHW"))
        return y + b[None, :, None, None]

    def bn(y, g, be, m, v):
        return ((y - m[None, :, None, None])
                / jnp.sqrt(v[None, :, None, None] + eps)
                * g[None, :, None, None] + be[None, :, None, None])

    y = jax.nn.relu(bn(conv(x, p["w1"], p["b1"], strides),
                       p["gamma1"], p["beta1"], p["mean1"], p["var1"]))
    y = bn(conv(y, p["w2"], p["b2"], 1),
           p["gamma2"], p["beta2"], p["mean2"], p["var2"])
    sc = conv(x, p["w3"], p["b3"], strides) if use_1x1conv else x
    return jax.nn.relu(y + sc)


# ----------------------------------------------------------------------------- params
def init_params(key, cin, cout, use_1x1conv):
    ks = jax.random.split(key, 16)
    n = lambda k, sh: jax.random.normal(k, sh, jnp.float32)
    p = {
        "w1": 0.1 * n(ks[0], (cout, cin, 3, 3)), "b1": 0.1 * n(ks[1], (cout,)),
        "w2": 0.1 * n(ks[2], (cout, cout, 3, 3)), "b2": 0.1 * n(ks[3], (cout,)),
        "gamma1": 1.0 + 0.1 * n(ks[4], (cout,)), "beta1": 0.1 * n(ks[5], (cout,)),
        "mean1": 0.1 * n(ks[6], (cout,)), "var1": 0.5 + jnp.abs(n(ks[7], (cout,))),
        "gamma2": 1.0 + 0.1 * n(ks[8], (cout,)), "beta2": 0.1 * n(ks[9], (cout,)),
        "mean2": 0.1 * n(ks[10], (cout,)), "var2": 0.5 + jnp.abs(n(ks[11], (cout,))),
    }
    if use_1x1conv:
        p["w3"] = 0.1 * n(ks[12], (cout, cin, 3, 3))
        p["b3"] = 0.1 * n(ks[13], (cout,))
    return p


# ----------------------------------------------------------------------------- main
if __name__ == "__main__":
    key = jax.random.PRNGKey(0)
    kx, kp1, kp2 = jax.random.split(key, 3)

    # Tolerance loosened from 1e-4 because the MXU runs bf16 operands
    # (f32 accumulate / epilogue); structural bugs would show as O(1) errors.
    ATOL = RTOL = 1e-1

    # case 1: default Residual(4, 4) -> identity shortcut
    x = jax.random.normal(kx, (2, 4, 16, 16), jnp.float32)        # NCHW
    p1 = init_params(kp1, 4, 4, use_1x1conv=False)
    out1 = jax.block_until_ready(residual_block(x, p1, use_1x1conv=False, strides=1))
    ref1 = residual_block_ref(x, p1, use_1x1conv=False, strides=1)
    assert out1.shape == (2, 4, 16, 16)
    assert jnp.allclose(out1, ref1, atol=ATOL, rtol=RTOL), (
        "case1 mismatch", float(jnp.max(jnp.abs(out1 - ref1))))

    # case 2: Residual(4, 8, use_1x1conv=True, strides=2) -> projection shortcut
    p2 = init_params(kp2, 4, 8, use_1x1conv=True)
    out2 = jax.block_until_ready(residual_block(x, p2, use_1x1conv=True, strides=2))
    ref2 = residual_block_ref(x, p2, use_1x1conv=True, strides=2)
    assert out2.shape == (2, 8, 8, 8)
    assert jnp.allclose(out2, ref2, atol=ATOL, rtol=RTOL), (
        "case2 mismatch", float(jnp.max(jnp.abs(out2 - ref2))))

    print("KERNEL_OK")
</pallas_src>

<mosaic_0001>
module attributes {stable_mosaic.version = 11 : i64} {
  func.func @_conv3x3_fused_kernel(%arg0: i32, %arg1: i32, %arg2: memref<1x18x18x4xf32, #tpu.memory_space<vmem>>, %arg3: memref<36x128xbf16, #tpu.memory_space<vmem>>, %arg4: memref<1x128xf32, #tpu.memory_space<vmem>>, %arg5: memref<1x128xf32, #tpu.memory_space<vmem>>, %arg6: memref<1x128x128xf32, #tpu.memory_space<vmem>>) attributes {dimension_semantics = [#tpu.dimension_semantics<parallel>, #tpu.dimension_semantics<parallel>], iteration_bounds = array<i64: 2, 2>, scalar_prefetch = 0 : i64, scratch_operands = 0 : i64, tpu.core_type = #tpu.core_type<tc>, window_params = [{transform_indices = @transform_0, window_bounds = array<i64: 1, 18, 18, 4>}, {pipeline_mode = #tpu.pipeline_mode<synchronous>, transform_indices = @transform_1, window_bounds = array<i64: 36, 128>}, {pipeline_mode = #tpu.pipeline_mode<synchronous>, transform_indices = @transform_2, window_bounds = array<i64: 1, 128>}, {pipeline_mode = #tpu.pipeline_mode<synchronous>, transform_indices = @transform_3, window_bounds = array<i64: 1, 128>}, {transform_indices = @transform_4, window_bounds = array<i64: 1, 128, 128>}]} {
    %c8_i32 = arith.constant 8 : i32
    %0 = arith.muli %arg1, %c8_i32 : i32
    %c0_i32 = arith.constant 0 : i32
    %1 = arith.addi %0, %c0_i32 : i32
    %c0 = arith.constant 0 : index
    %2 = arith.index_cast %1 : i32 to index
    %c0_0 = arith.constant 0 : index
    %c0_1 = arith.constant 0 : index
    %3 = vector.load %arg2[%c0, %2, %c0_0, %c0_1] : memref<1x18x18x4xf32, #tpu.memory_space<vmem>>, vector<1x8x16x4xf32>
    %4 = vector.shape_cast %3 : vector<1x8x16x4xf32> to vector<8x16x4xf32>
    %c0_i32_2 = arith.constant 0 : i32
    %5 = arith.addi %0, %c0_i32_2 : i32
    %c0_3 = arith.constant 0 : index
    %6 = arith.index_cast %5 : i32 to index
    %c1 = arith.constant 1 : index
    %c0_4 = arith.constant 0 : index
    %7 = vector.load %arg2[%c0_3, %6, %c1, %c0_4] : memref<1x18x18x4xf32, #tpu.memory_space<vmem>>, vector<1x8x16x4xf32>
    %8 = vector.shape_cast %7 : vector<1x8x16x4xf32> to vector<8x16x4xf32>
    %c0_i32_5 = arith.constant 0 : i32
    %9 = arith.addi %0, %c0_i32_5 : i32
    %c0_6 = arith.constant 0 : index
    %10 = arith.index_cast %9 : i32 to index
    %c2 = arith.constant 2 : index
    %c0_7 = arith.constant 0 : index
    %11 = vector.load %arg2[%c0_6, %10, %c2, %c0_7] : memref<1x18x18x4xf32, #tpu.memory_space<vmem>>, vector<1x8x16x4xf32>
    %12 = vector.shape_cast %11 : vector<1x8x16x4xf32> to vector<8x16x4xf32>
    %c1_i32 = arith.constant 1 : i32
    %13 = arith.addi %0, %c1_i32 : i32
    %c0_8 = arith.constant 0 : index
    %14 = arith.index_cast %13 : i32 to index
    %c0_9 = arith.constant 0 : index
    %c0_10 = arith.constant 0 : index
    %15 = vector.load %arg2[%c0_8, %14, %c0_9, %c0_10] : memref<1x18x18x4xf32, #tpu.memory_space<vmem>>, vector<1x8x16x4xf32>
    %16 = vector.shape_cast %15 : vector<1x8x16x4xf32> to vector<8x16x4xf32>
    %c1_i32_11 = arith.constant 1 : i32
    %17 = arith.addi %0, %c1_i32_11 : i32
    %c0_12 = arith.constant 0 : index
    %18 = arith.index_cast %17 : i32 to index
    %c1_13 = arith.constant 1 : index
    %c0_14 = arith.constant 0 : index
    %19 = vector.load %arg2[%c0_12, %18, %c1_13, %c0_14] : memref<1x18x18x4xf32, #tpu.memory_space<vmem>>, vector<1x8x16x4xf32>
    %20 = vector.shape_cast %19 : vector<1x8x16x4xf32> to vector<8x16x4xf32>
    %c1_i32_15 = arith.constant 1 : i32
    %21 = arith.addi %0, %c1_i32_15 : i32
    %c0_16 = arith.constant 0 : index
    %22 = arith.index_cast %21 : i32 to index
    %c2_17 = arith.constant 2 : index
    %c0_18 = arith.constant 0 : index
    %23 = vector.load %arg2[%c0_16, %22, %c2_17, %c0_18] : memref<1x18x18x4xf32, #tpu.memory_space<vmem>>, vector<1x8x16x4xf32>
    %24 = vector.shape_cast %23 : vector<1x8x16x4xf32> to vector<8x16x4xf32>
    %c2_i32 = arith.constant 2 : i32
    %25 = arith.addi %0, %c2_i32 : i32
    %c0_19 = arith.constant 0 : index
    %26 = arith.index_cast %25 : i32 to index
    %c0_20 = arith.constant 0 : index
    %c0_21 = arith.constant 0 : index
    %27 = vector.load %arg2[%c0_19, %26, %c0_20, %c0_21] : memref<1x18x18x4xf32, #tpu.memory_space<vmem>>, vector<1x8x16x4xf32>
    %28 = vector.shape_cast %27 : vector<1x8x16x4xf32> to vector<8x16x4xf32>
    %c2_i32_22 = arith.constant 2 : i32
    %29 = arith.addi %0, %c2_i32_22 : i32
    %c0_23 = arith.constant 0 : index
    %30 = arith.index_cast %29 : i32 to index
    %c1_24 = arith.constant 1 : index
    %c0_25 = arith.constant 0 : index
    %31 = vector.load %arg2[%c0_23, %30, %c1_24, %c0_25] : memref<1x18x18x4xf32, #tpu.memory_space<vmem>>, vector<1x8x16x4xf32>
    %32 = vector.shape_cast %31 : vector<1x8x16x4xf32> to vector<8x16x4xf32>
    %c2_i32_26 = arith.constant 2 : i32
    %33 = arith.addi %0, %c2_i32_26 : i32
    %c0_27 = arith.constant 0 : index
    %34 = arith.index_cast %33 : i32 to index
    %c2_28 = arith.constant 2 : index
    %c0_29 = arith.constant 0 : index
    %35 = vector.load %arg2[%c0_27, %34, %c2_28, %c0_29] : memref<1x18x18x4xf32, #tpu.memory_space<vmem>>, vector<1x8x16x4xf32>
    %36 = vector.shape_cast %35 : vector<1x8x16x4xf32> to vector<8x16x4xf32>
    %37 = tpu.concatenate %4, %8, %12, %16, %20, %24, %28, %32, %36 in 2 : vector<8x16x4xf32>, vector<8x16x4xf32>, vector<8x16x4xf32>, vector<8x16x4xf32>, vector<8x16x4xf32>, vector<8x16x4xf32>, vector<8x16x4xf32>, vector<8x16x4xf32>, vector<8x16x4xf32> -> vector<8x16x36xf32>
    %38 = vector.shape_cast %37 : vector<8x16x36xf32> to vector<128x36xf32>
    %39 = arith.truncf %38 : vector<128x36xf32> to vector<128x36xbf16>
    %c0_30 = arith.constant 0 : index
    %c0_31 = arith.constant 0 : index
    %40 = vector.load %arg3[%c0_30, %c0_31] : memref<36x128xbf16, #tpu.memory_space<vmem>>, vector<36x128xbf16>
    %cst = arith.constant dense<0.000000e+00> : vector<128x128xf32>
    %41 = tpu.matmul %39, %40, %cst {dimension_numbers = #tpu.dot_dimension_numbers<[1], [0], [0], [1], [0, 0, 1, 1], [], []>} : vector<128x36xbf16>, vector<36x128xbf16>, vector<128x128xf32> -> vector<128x128xf32>
    %c0_32 = arith.constant 0 : index
    %c0_33 = arith.constant 0 : index
    %42 = vector.load %arg4[%c0_32, %c0_33] : memref<1x128xf32, #tpu.memory_space<vmem>>, vector<1x128xf32>
    %43 = vector.broadcast %42 : vector<1x128xf32> to vector<128x128xf32>
    %44 = arith.mulf %41, %43 : vector<128x128xf32>
    %c0_34 = arith.constant 0 : index
    %c0_35 = arith.constant 0 : index
    %45 = vector.load %arg5[%c0_34, %c0_35] : memref<1x128xf32, #tpu.memory_space<vmem>>, vector<1x128xf32>
    %46 = vector.broadcast %45 : vector<1x128xf32> to vector<128x128xf32>
    %47 = arith.addf %44, %46 : vector<128x128xf32>
    %cst_36 = arith.constant 0.000000e+00 : f32
    %48 = vector.broadcast %cst_36 : f32 to vector<128x128xf32>
    %49 = arith.maximumf %47, %48 : vector<128x128xf32>
    %c0_37 = arith.constant 0 : index
    %c0_38 = arith.constant 0 : index
    %c0_39 = arith.constant 0 : index
    %50 = vector.load %arg6[%c0_37, %c0_38, %c0_39] : memref<1x128x128xf32, #tpu.memory_space<vmem>>, vector<1x128x128xf32>
    %51 = vector.shape_cast %50 : vector<1x128x128xf32> to vector<128x128xf32>
    %52 = vector.shape_cast %49 : vector<128x128xf32> to vector<1x128x128xf32>
    tpu.vector_store %arg6[%c0_37, %c0_38, %c0_39], %52 {strides = array<i32>} : memref<1x128x128xf32, #tpu.memory_space<vmem>>, vector<1x128x128xf32>,
    return
  }
  func.func @transform_0(%arg0: i32, %arg1: i32) -> (i32, i32, i32, i32) {
    %c0_i32 = arith.constant 0 : i32
    %c0_i32_0 = arith.constant 0 : i32
    %c0_i32_1 = arith.constant 0 : i32
    %c0_i32_2 = arith.constant 0 : i32
    return %arg0, %c0_i32, %c0_i32_0, %c0_i32_1 : i32, i32, i32, i32
  }
  func.func @transform_1(%arg0: i32, %arg1: i32) -> (i32, i32) {
    %c0_i32 = arith.constant 0 : i32
    %c0_i32_0 = arith.constant 0 : i32
    %c0_i32_1 = arith.constant 0 : i32
    return %c0_i32, %c0_i32_0 : i32, i32
  }
  func.func @transform_2(%arg0: i32, %arg1: i32) -> (i32, i32) {
    %c0_i32 = arith.constant 0 : i32
    %c0_i32_0 = arith.constant 0 : i32
    %c0_i32_1 = arith.constant 0 : i32
    return %c0_i32, %c0_i32_0 : i32, i32
  }
  func.func @transform_3(%arg0: i32, %arg1: i32) -> (i32, i32) {
    %c0_i32 = arith.constant 0 : i32
    %c0_i32_0 = arith.constant 0 : i32
    %c0_i32_1 = arith.constant 0 : i32
    return %c0_i32, %c0_i32_0 : i32, i32
  }
  func.func @transform_4(%arg0: i32, %arg1: i32) -> (i32, i32, i32) {
    %c0_i32 = arith.constant 0 : i32
    %c0_i32_0 = arith.constant 0 : i32
    return %arg0, %arg1, %c0_i32 : i32, i32, i32
  }
}

</mosaic_0001>

<llo_original>
// kernel: tpu_custom_call.1
$region0: #{tpu_custom_call.1}
  #allocation0 [shape = 'u32[]', space=smem, size = 0x4, offset = 0x4, fixed_abs, tag = 'smem constant byte address 0x4 - core index']
  #allocation1 [shape = 'u32[72,128]{1,0:T(1,128)}', space=vmem, size = 0x9000, scoped, tag = 'internal scratch']
  %s0 = inlined_call_operand.vmem [shape: f32[2,18,18,4], index: 0, kind: input, shape index: {}]
  %s1 = inlined_call_operand.vmem [shape: bf16[36,128], index: 1, kind: input, shape index: {}]
  %s2 = inlined_call_operand.vmem [shape: f32[1,128], index: 2, kind: input, shape index: {}]
  %s3 = inlined_call_operand.vmem [shape: f32[1,128], index: 3, kind: input, shape index: {}]
  %s4 = inlined_call_operand.hbm [shape: f32[2,256,128], index: 4, kind: output, shape index: {}]
  %s5 = sld [smem:[#allocation0]]
  $region49: #{tpu_custom_call.1} parent=0
    _
  %s7 = ssub.s32 1, %s5
  %s8 = scalar_select 0, %s7, %s5
  $region1: #{tpu_custom_call.1} parent=0
    #allocation2 [shape = 'u8[131072]{0}', space=vmem, size = 0x20000, scoped, tag = 'output window, operand 0']
    #allocation3 [shape = 's32[2]{0}', space=sflag, size = 0x8, scoped, tag = 'scoped memory for tpu_custom_call.1']
    %9 = vsyncpa [#allocation3], 0
    %s10 = scalar_lea.sflag [#allocation3], 1
    %11 = vsyncpa %s10, 0
    loop: start=0, step=1, limit=6
    $region2: #{tpu_custom_call.1} parent=1 // loop_pre_header
      _
    $region3: #{tpu_custom_call.1} parent=1 // loop_header
      %s13 = sphi 0, %s17
      %p14 = scmp.ge.s32.totalorder %s13, 6
      %s20 = sphi 0, %s32
      %s21 = sphi 0, %s28
      %s22 = sphi 0, %s20
      %s23 = sphi 0, %s21
      %s24 = sphi 0, %s22
      %s25 = sphi 0, %s23
      %s35 = sphi 0, %s37
      %s38 = sphi 0, %s35
      %s39 = sphi 0, %s38
      %s55 = sphi 0, %s39
      %s59 = sphi 0, %s59
      %s61 = sphi 0, %s59
      %s62 = sphi 0, %s61
      %s76 = sphi 0, %s62
      %s80 = sphi 0, %s80
      %s82 = sphi 0, %s80
      %s83 = sphi 0, %s82
      %s97 = sphi 0, %s83
      %s101 = sphi 0, %s101
      %s103 = sphi 0, %s101
      %s104 = sphi 0, %s103
      %s118 = sphi 0, %s104
      %s126 = sphi 0, %s128
      %s129 = sphi 0, %s126
      %s130 = sphi 0, %s129
      %s146 = sphi 0, %s130
    $region4: #{tpu_custom_call.1} parent=1 // loop_header_branch
      %16 = sbr.rel (%p14) target = $region8
    $region5: #{tpu_custom_call.1} parent=1 // loop_body
      %s18 = ssub.s32 %s13, 1
      %s19 = ssub.s32 %s13, 2
      %s26 = sadd.s32 1, %s21
      %p27 = scmp.ge.s32.totalorder %s26, 2
      %s28 = scalar_select %p27, 0, %s26
      %s29 = sadd.s32 1, %s20
      %s30 = scalar_select %p27, %s29, %s20
      %p31 = scmp.ge.s32.totalorder %s30, 2
      %s32 = scalar_select %p31, 0, %s30
      %s33 = ssub.s32 %s20, %s32
      %p34 = scmp.eq.s32.totalorder %s33, 0
      %s36 = sadd.s32 %s35, 1
      %s37 = scalar_select %p34, %s35, %s36
      %p40 = pneg %p34
      %p41 = scmp.eq.s32.totalorder %s13, 3
      %p42 = por %p40, %p41
      %p43 = scmp.ne.s32.totalorder %s35, %s38
      %p44 = scmp.eq.s32.totalorder %s13, 0
      %p45 = por %p43, %p44
      %p46 = scmp.ne.s32.totalorder %s35, %s38
      %p47 = scmp.eq.s32.totalorder %s18, 3
      %p48 = por %p46, %p47
      %p49 = scmp.ne.s32.totalorder %s38, %s39
      %p50 = scmp.eq.s32.totalorder %s18, 0
      %p51 = por %p49, %p50
      %p52 = scmp.ne.s32.totalorder %s38, %s39
      %p53 = scmp.eq.s32.totalorder %s19, 3
      %p54 = por %p52, %p53
      %p56 = scmp.ne.s32.totalorder %s39, %s55
      %p57 = scmp.eq.s32.totalorder %s19, 0
      %p58 = por %p56, %p57
      %s60 = sadd.s32 %s59, 1
      %p63 = scmp.eq.s32.totalorder %s13, 3
      %p64 = scmp.ne.s32.totalorder %s59, %s61
      %p65 = scmp.eq.s32.totalorder %s13, 0
      %p66 = por %p64, %p65
      %p67 = scmp.ne.s32.totalorder %s59, %s61
      %p68 = scmp.eq.s32.totalorder %s18, 3
      %p69 = por %p67, %p68
      %p70 = scmp.ne.s32.totalorder %s61, %s62
      %p71 = scmp.eq.s32.totalorder %s18, 0
      %p72 = por %p70, %p71
      %p73 = scmp.ne.s32.totalorder %s61, %s62
      %p74 = scmp.eq.s32.totalorder %s19, 3
      %p75 = por %p73, %p74
      %p77 = scmp.ne.s32.totalorder %s62, %s76
      %p78 = scmp.eq.s32.totalorder %s19, 0
      %p79 = por %p77, %p78
      %s81 = sadd.s32 %s80, 1
      %p84 = scmp.eq.s32.totalorder %s13, 3
      %p85 = scmp.ne.s32.totalorder %s80, %s82
      %p86 = scmp.eq.s32.totalorder %s13, 0
      %p87 = por %p85, %p86
      %p88 = scmp.ne.s32.totalorder %s80, %s82
      %p89 = scmp.eq.s32.totalorder %s18, 3
      %p90 = por %p88, %p89
      %p91 = scmp.ne.s32.totalorder %s82, %s83
      %p92 = scmp.eq.s32.totalorder %s18, 0
      %p93 = por %p91, %p92
      %p94 = scmp.ne.s32.totalorder %s82, %s83
      %p95 = scmp.eq.s32.totalorder %s19, 3
      %p96 = por %p94, %p95
      %p98 = scmp.ne.s32.totalorder %s83, %s97
      %p99 = scmp.eq.s32.totalorder %s19, 0
      %p100 = por %p98, %p99
      %s102 = sadd.s32 %s101, 1
      %p105 = scmp.eq.s32.totalorder %s13, 3
      %p106 = scmp.ne.s32.totalorder %s101, %s103
      %p107 = scmp.eq.s32.totalorder %s13, 0
      %p108 = por %p106, %p107
      %p109 = scmp.ne.s32.totalorder %s101, %s103
      %p110 = scmp.eq.s32.totalorder %s18, 3
      %p111 = por %p109, %p110
      %p112 = scmp.ne.s32.totalorder %s103, %s104
      %p113 = scmp.eq.s32.totalorder %s18, 0
      %p114 = por %p112, %p113
      %p115 = scmp.ne.s32.totalorder %s103, %s104
      %p116 = scmp.eq.s32.totalorder %s19, 3
      %p117 = por %p115, %p116
      %p119 = scmp.ne.s32.totalorder %s104, %s118
      %p120 = scmp.eq.s32.totalorder %s19, 0
      %p121 = por %p119, %p120
      %s122 = ssub.s32 %s20, %s32
      %s123 = ssub.s32 %s21, %s28
      %s124 = sor.u32 %s122, %s123
      %p125 = scmp.eq.s32.totalorder %s124, 0
      %s127 = sadd.s32 %s126, 1
      %s128 = scalar_select %p125, %s126, %s127
      %p131 = pneg %p125
      %p132 = scmp.eq.s32.totalorder %s13, 3
      %p133 = por %p131, %p132
      %p134 = scmp.ne.s32.totalorder %s126, %s129
      %p135 = scmp.eq.s32.totalorder %s13, 0
      %p136 = por %p134, %p135
      %p137 = scmp.ne.s32.totalorder %s126, %s129
      %p138 = scmp.eq.s32.totalorder %s18, 3
      %p139 = por %p137, %p138
      %p140 = scmp.ne.s32.totalorder %s129, %s130
      %p141 = scmp.eq.s32.totalorder %s18, 0
      %p142 = por %p140, %p141
      %p143 = scmp.ne.s32.totalorder %s129, %s130
      %p144 = scmp.eq.s32.totalorder %s19, 3
      %p145 = por %p143, %p144
      %p147 = scmp.ne.s32.totalorder %s130, %s146
      %p148 = scmp.eq.s32.totalorder %s19, 0
      %p149 = por %p147, %p148
      %p150 = scmp.le.s32.totalorder 1, %s13
      %p151 = scmp.lt.s32.totalorder %s13, 5
      %p152 = pnand %p150, %p151
      %p153 = pneg %p152
      // Predicated region
      $region9: #{tpu_custom_call.1} parent=5 // pred_check
        _
      $region10: #{tpu_custom_call.1} parent=5 // pred_check_branch
        %155 = sbr.rel (%p152) target = $region12
      $region11: #{tpu_custom_call.1} parent=5 // pred_region
        %s156 = ssub.s32 %s13, 1
        // Predicated region
        $region13: #{tpu_custom_call.1} parent=11 // pred_check
          %p157 = pneg %p72
        $region14: #{tpu_custom_call.1} parent=11 // pred_check_branch
          %159 = sbr.rel (%p157) target = $region16
        $region15: #{tpu_custom_call.1} parent=11 // pred_region
          _
        $region16: #{tpu_custom_call.1} parent=11 // pred_fallthru
          _
        // Predicated region
        $region17: #{tpu_custom_call.1} parent=11 // pred_check
          %p160 = pneg %p93
        $region18: #{tpu_custom_call.1} parent=11 // pred_check_branch
          %162 = sbr.rel (%p160) target = $region20
        $region19: #{tpu_custom_call.1} parent=11 // pred_region
          _
        $region20: #{tpu_custom_call.1} parent=11 // pred_fallthru
          _
        // Predicated region
        $region21: #{tpu_custom_call.1} parent=11 // pred_check
          %p163 = pneg %p114
        $region22: #{tpu_custom_call.1} parent=11 // pred_check_branch
          %165 = sbr.rel (%p163) target = $region24
        $region23: #{tpu_custom_call.1} parent=11 // pred_region
          _
        $region24: #{tpu_custom_call.1} parent=11 // pred_fallthru
          _
      $region12: #{tpu_custom_call.1} parent=5 // pred_fallthru
        _
      %p166 = scmp.lt.s32.totalorder %s13, 4
      // Predicated region
      $region25: #{tpu_custom_call.1} parent=5 // pred_check
        %p167 = pneg %p166
      $region26: #{tpu_custom_call.1} parent=5 // pred_check_branch
        %169 = sbr.rel (%p167) target = $region28
      $region27: #{tpu_custom_call.1} parent=5 // pred_region
        // Predicated region
        $region29: #{tpu_custom_call.1} parent=27 // pred_check
          %p170 = pneg %p45
        $region30: #{tpu_custom_call.1} parent=27 // pred_check_branch
          %172 = sbr.rel (%p170) target = $region32
        $region31: #{tpu_custom_call.1} parent=27 // pred_region
          %p173 = scmp.lt.s32.totalorder %s20, 1
          %s174 = scalar_select %p173, %s20, 1
          %s175 = smul.addr %s174, 54
          %s176 = smul.addr %s175, 8
          %s177 = scalar_lea.vmem %s0, %s176
        $region32: #{tpu_custom_call.1} parent=27 // pred_fallthru
          _
      $region28: #{tpu_custom_call.1} parent=5 // pred_fallthru
        _
      %p178 = scmp.le.s32.totalorder 1, %s13
      %p179 = scmp.lt.s32.totalorder %s13, 5
      %p180 = pnand %p178, %p179
      %p181 = pneg %p180
      // Predicated region
      $region33: #{tpu_custom_call.1} parent=5 // pred_check
        _
      $region34: #{tpu_custom_call.1} parent=5 // pred_check_branch
        %183 = sbr.rel (%p180) target = $region36
      $region35: #{tpu_custom_call.1} parent=5 // pred_region
        %s184 = ssub.s32 %s13, 1
        %p185 = scmp.lt.s32.totalorder %s22, 1
        %s186 = scalar_select %p185, %s22, 1
        %s187 = smul.addr %s186, 54
        %s188 = smul.addr %s187, 8
        %s189 = scalar_lea.vmem %s0, %s188
        %p190 = pneg %p51
        %p191 = pneg %p48
        %p192 = pneg %p72
        %p193 = pneg %p69
        %p194 = pneg %p93
        %p195 = pneg %p90
        %p196 = pneg %p114
        %p197 = pneg %p111
        %p198 = pneg %p142
        %p199 = pneg %p139
        %s200 = sand.u32 %s129, 1
        %s201 = scalar_lea.sflag [#allocation3], %s200
        %s202 = sand.u32 %s129, 1
        %s203 = smul.addr %s202, 128
        %s204 = scalar_lea.vmem [#allocation2], %s203
        %p205 = scmp.lt.s32.totalorder %s22, 1
        %s206 = scalar_select %p205, %s22, 1
        %s207 = smul.addr %s206, 54
        %s208 = smul.addr %s207, 8
        %s209 = scalar_lea.vmem %s0, %s208
        %s210 = smul.u32 16, %s23
        %s212 = smul.u32 %s23, 8
        %s213 = smul.u32 %s212, 24
        %s214 = scalar_lea.vmem %s209, %s213
        %v215 = vld [vmem:[%s214] sm:$0xff]
        %v216 = vld [vmem:[%s214 + $0x8] sm:$0xff]
        %v217 = vld [vmem:[%s214 + $0x18] sm:$0xff]
        %v218 = vld [vmem:[%s214 + $0x20] sm:$0xff]
        %v219 = vld [vmem:[%s214 + $0x30] sm:$0xff]
        %v220 = vld [vmem:[%s214 + $0x38] sm:$0xff]
        %v221 = vld [vmem:[%s214 + $0x48] sm:$0xff]
        %v222 = vld [vmem:[%s214 + $0x50] sm:$0xff]
        %v223 = vld [vmem:[%s214 + $0x60] sm:$0xff]
        %v224 = vld [vmem:[%s214 + $0x68] sm:$0xff]
        %v225 = vld [vmem:[%s214 + $0x78] sm:$0xff]
        %v226 = vld [vmem:[%s214 + $0x80] sm:$0xff]
        %v227 = vld [vmem:[%s214 + $0x90] sm:$0xff]
        %v228 = vld [vmem:[%s214 + $0x98] sm:$0xff]
        %v229 = vld [vmem:[%s214 + $0xa8] sm:$0xff]
        %v230 = vld [vmem:[%s214 + $0xb0] sm:$0xff]
        %v231 = vld [vmem:[%s214 + $0x1] sm:$0xff]
        %v232 = vld [vmem:[%s214 + $0x9] sm:$0xff]
        %v233 = vld [vmem:[%s214 + $0x19] sm:$0xff]
        %v234 = vld [vmem:[%s214 + $0x21] sm:$0xff]
        %v235 = vld [vmem:[%s214 + $0x31] sm:$0xff]
        %v236 = vld [vmem:[%s214 + $0x39] sm:$0xff]
        %v237 = vld [vmem:[%s214 + $0x49] sm:$0xff]
        %v238 = vld [vmem:[%s214 + $0x51] sm:$0xff]
        %v239 = vld [vmem:[%s214 + $0x61] sm:$0xff]
        %v240 = vld [vmem:[%s214 + $0x69] sm:$0xff]
        %v241 = vld [vmem:[%s214 + $0x79] sm:$0xff]
        %v242 = vld [vmem:[%s214 + $0x81] sm:$0xff]
        %v243 = vld [vmem:[%s214 + $0x91] sm:$0xff]
        %v244 = vld [vmem:[%s214 + $0x99] sm:$0xff]
        %v245 = vld [vmem:[%s214 + $0xa9] sm:$0xff]
        %v246 = vld [vmem:[%s214 + $0xb1] sm:$0xff]
        %v247 = vld [vmem:[%s214 + $0x2] sm:$0xff]
        %v248 = vld [vmem:[%s214 + $0xa] sm:$0xff]
        %v249 = vld [vmem:[%s214 + $0x1a] sm:$0xff]
        %v250 = vld [vmem:[%s214 + $0x22] sm:$0xff]
        %v251 = vld [vmem:[%s214 + $0x32] sm:$0xff]
        %v252 = vld [vmem:[%s214 + $0x3a] sm:$0xff]
        %v253 = vld [vmem:[%s214 + $0x4a] sm:$0xff]
        %v254 = vld [vmem:[%s214 + $0x52] sm:$0xff]
        %v255 = vld [vmem:[%s214 + $0x62] sm:$0xff]
        %v256 = vld [vmem:[%s214 + $0x6a] sm:$0xff]
        %v257 = vld [vmem:[%s214 + $0x7a] sm:$0xff]
        %v258 = vld [vmem:[%s214 + $0x82] sm:$0xff]
        %v259 = vld [vmem:[%s214 + $0x92] sm:$0xff]
        %v260 = vld [vmem:[%s214 + $0x9a] sm:$0xff]
        %v261 = vld [vmem:[%s214 + $0xaa] sm:$0xff]
        %v262 = vld [vmem:[%s214 + $0xb2] sm:$0xff]
        %s263 = sadd.s32 %s212, 1
        %s264 = smul.u32 %s263, 24
        %s265 = scalar_lea.vmem %s209, %s264
        %v266 = vld [vmem:[%s265] sm:$0xff]
        %v267 = vld [vmem:[%s265 + $0x8] sm:$0xff]
        %v268 = vld [vmem:[%s265 + $0x18] sm:$0xff]
        %v269 = vld [vmem:[%s265 + $0x20] sm:$0xff]
        %v270 = vld [vmem:[%s265 + $0x30] sm:$0xff]
        %v271 = vld [vmem:[%s265 + $0x38] sm:$0xff]
        %v272 = vld [vmem:[%s265 + $0x48] sm:$0xff]
        %v273 = vld [vmem:[%s265 + $0x50] sm:$0xff]
        %v274 = vld [vmem:[%s265 + $0x60] sm:$0xff]
        %v275 = vld [vmem:[%s265 + $0x68] sm:$0xff]
        %v276 = vld [vmem:[%s265 + $0x78] sm:$0xff]
        %v277 = vld [vmem:[%s265 + $0x80] sm:$0xff]
        %v278 = vld [vmem:[%s265 + $0x90] sm:$0xff]
        %v279 = vld [vmem:[%s265 + $0x98] sm:$0xff]
        %v280 = vld [vmem:[%s265 + $0xa8] sm:$0xff]
        %v281 = vld [vmem:[%s265 + $0xb0] sm:$0xff]
        %v282 = vld [vmem:[%s265 + $0x1] sm:$0xff]
        %v283 = vld [vmem:[%s265 + $0x9] sm:$0xff]
        %v284 = vld [vmem:[%s265 + $0x19] sm:$0xff]
        %v285 = vld [vmem:[%s265 + $0x21] sm:$0xff]
        %v286 = vld [vmem:[%s265 + $0x31] sm:$0xff]
        %v287 = vld [vmem:[%s265 + $0x39] sm:$0xff]
        %v288 = vld [vmem:[%s265 + $0x49] sm:$0xff]
        %v289 = vld [vmem:[%s265 + $0x51] sm:$0xff]
        %v290 = vld [vmem:[%s265 + $0x61] sm:$0xff]
        %v291 = vld [vmem:[%s265 + $0x69] sm:$0xff]
        %v292 = vld [vmem:[%s265 + $0x79] sm:$0xff]
        %v293 = vld [vmem:[%s265 + $0x81] sm:$0xff]
        %v294 = vld [vmem:[%s265 + $0x91] sm:$0xff]
        %v295 = vld [vmem:[%s265 + $0x99] sm:$0xff]
        %v296 = vld [vmem:[%s265 + $0xa9] sm:$0xff]
        %v297 = vld [vmem:[%s265 + $0xb1] sm:$0xff]
        %v298 = vld [vmem:[%s265 + $0x2] sm:$0xff]
        %v299 = vld [vmem:[%s265 + $0xa] sm:$0xff]
        %v300 = vld [vmem:[%s265 + $0x1a] sm:$0xff]
        %v301 = vld [vmem:[%s265 + $0x22] sm:$0xff]
        %v302 = vld [vmem:[%s265 + $0x32] sm:$0xff]
        %v303 = vld [vmem:[%s265 + $0x3a] sm:$0xff]
        %v304 = vld [vmem:[%s265 + $0x4a] sm:$0xff]
        %v305 = vld [vmem:[%s265 + $0x52] sm:$0xff]
        %v306 = vld [vmem:[%s265 + $0x62] sm:$0xff]
        %v307 = vld [vmem:[%s265 + $0x6a] sm:$0xff]
        %v308 = vld [vmem:[%s265 + $0x7a] sm:$0xff]
        %v309 = vld [vmem:[%s265 + $0x82] sm:$0xff]
        %v310 = vld [vmem:[%s265 + $0x92] sm:$0xff]
        %v311 = vld [vmem:[%s265 + $0x9a] sm:$0xff]
        %v312 = vld [vmem:[%s265 + $0xaa] sm:$0xff]
        %v313 = vld [vmem:[%s265 + $0xb2] sm:$0xff]
        %s314 = sadd.s32 %s212, 2
        %s315 = smul.u32 %s314, 24
        %s316 = scalar_lea.vmem %s209, %s315
        %v317 = vld [vmem:[%s316] sm:$0xff]
        %v318 = vld [vmem:[%s316 + $0x8] sm:$0xff]
        %v319 = vld [vmem:[%s316 + $0x18] sm:$0xff]
        %v320 = vld [vmem:[%s316 + $0x20] sm:$0xff]
        %v321 = vld [vmem:[%s316 + $0x30] sm:$0xff]
        %v322 = vld [vmem:[%s316 + $0x38] sm:$0xff]
        %v323 = vld [vmem:[%s316 + $0x48] sm:$0xff]
        %v324 = vld [vmem:[%s316 + $0x50] sm:$0xff]
        %v325 = vld [vmem:[%s316 + $0x60] sm:$0xff]
        %v326 = vld [vmem:[%s316 + $0x68] sm:$0xff]
        %v327 = vld [vmem:[%s316 + $0x78] sm:$0xff]
        %v328 = vld [vmem:[%s316 + $0x80] sm:$0xff]
        %v329 = vld [vmem:[%s316 + $0x90] sm:$0xff]
        %v330 = vld [vmem:[%s316 + $0x98] sm:$0xff]
        %v331 = vld [vmem:[%s316 + $0xa8] sm:$0xff]
        %v332 = vld [vmem:[%s316 + $0xb0] sm:$0xff]
        %v333 = vld [vmem:[%s316 + $0x1] sm:$0xff]
        %v334 = vld [vmem:[%s316 + $0x9] sm:$0xff]
        %v335 = vld [vmem:[%s316 + $0x19] sm:$0xff]
        %v336 = vld [vmem:[%s316 + $0x21] sm:$0xff]
        %v337 = vld [vmem:[%s316 + $0x31] sm:$0xff]
        %v338 = vld [vmem:[%s316 + $0x39] sm:$0xff]
        %v339 = vld [vmem:[%s316 + $0x49] sm:$0xff]
        %v340 = vld [vmem:[%s316 + $0x51] sm:$0xff]
        %v341 = vld [vmem:[%s316 + $0x61] sm:$0xff]
        %v342 = vld [vmem:[%s316 + $0x69] sm:$0xff]
        %v343 = vld [vmem:[%s316 + $0x79] sm:$0xff]
        %v344 = vld [vmem:[%s316 + $0x81] sm:$0xff]
        %v345 = vld [vmem:[%s316 + $0x91] sm:$0xff]
        %v346 = vld [vmem:[%s316 + $0x99] sm:$0xff]
        %v347 = vld [vmem:[%s316 + $0xa9] sm:$0xff]
        %v348 = vld [vmem:[%s316 + $0xb1] sm:$0xff]
        %v349 = vld [vmem:[%s316 + $0x2] sm:$0xff]
        %v350 = vld [vmem:[%s316 + $0xa] sm:$0xff]
        %v351 = vld [vmem:[%s316 + $0x1a] sm:$0xff]
        %v352 = vld [vmem:[%s316 + $0x22] sm:$0xff]
        %v353 = vld [vmem:[%s316 + $0x32] sm:$0xff]
        %v354 = vld [vmem:[%s316 + $0x3a] sm:$0xff]
        %v355 = vld [vmem:[%s316 + $0x4a] sm:$0xff]
        %v356 = vld [vmem:[%s316 + $0x52] sm:$0xff]
        %v357 = vld [vmem:[%s316 + $0x62] sm:$0xff]
        %v358 = vld [vmem:[%s316 + $0x6a] sm:$0xff]
        %v359 = vld [vmem:[%s316 + $0x7a] sm:$0xff]
        %v360 = vld [vmem:[%s316 + $0x82] sm:$0xff]
        %v361 = vld [vmem:[%s316 + $0x92] sm:$0xff]
        %v362 = vld [vmem:[%s316 + $0x9a] sm:$0xff]
        %v363 = vld [vmem:[%s316 + $0xaa] sm:$0xff]
        %v364 = vld [vmem:[%s316 + $0xb2] sm:$0xff]
        %381 = vrot.lane.b32.xlu0 %v231, 4
        %v382 = vpop.permute.xlu0 %381
        %383 = vrot.lane.b32.xlu0 %v232, 4
        %v384 = vpop.permute.xlu0 %383
        %385 = vrot.lane.b32.xlu0 %v233, 4
        %v386 = vpop.permute.xlu0 %385
        %387 = vrot.lane.b32.xlu0 %v234, 4
        %v388 = vpop.permute.xlu0 %387
        %389 = vrot.lane.b32.xlu0 %v235, 4
        %v390 = vpop.permute.xlu0 %389
        %391 = vrot.lane.b32.xlu0 %v236, 4
        %v392 = vpop.permute.xlu0 %391
        %393 = vrot.lane.b32.xlu0 %v237, 4
        %v394 = vpop.permute.xlu0 %393
        %395 = vrot.lane.b32.xlu0 %v238, 4
        %v396 = vpop.permute.xlu0 %395
        %397 = vrot.lane.b32.xlu0 %v239, 4
        %v398 = vpop.permute.xlu0 %397
        %399 = vrot.lane.b32.xlu0 %v240, 4
        %v400 = vpop.permute.xlu0 %399
        %401 = vrot.lane.b32.xlu0 %v241, 4
        %v402 = vpop.permute.xlu0 %401
        %403 = vrot.lane.b32.xlu0 %v242, 4
        %v404 = vpop.permute.xlu0 %403
        %405 = vrot.lane.b32.xlu0 %v243, 4
        %v406 = vpop.permute.xlu0 %405
        %407 = vrot.lane.b32.xlu0 %v244, 4
        %v408 = vpop.permute.xlu0 %407
        %409 = vrot.lane.b32.xlu0 %v245, 4
        %v410 = vpop.permute.xlu0 %409
        %411 = vrot.lane.b32.xlu0 %v246, 4
        %v412 = vpop.permute.xlu0 %411
        %445 = vrot.lane.b32.xlu0 %v247, 8
        %v446 = vpop.permute.xlu0 %445
        %447 = vrot.lane.b32.xlu0 %v248, 8
        %v448 = vpop.permute.xlu0 %447
        %449 = vrot.lane.b32.xlu0 %v249, 8
        %v450 = vpop.permute.xlu0 %449
        %451 = vrot.lane.b32.xlu0 %v250, 8
        %v452 = vpop.permute.xlu0 %451
        %453 = vrot.lane.b32.xlu0 %v251, 8
        %v454 = vpop.permute.xlu0 %453
        %455 = vrot.lane.b32.xlu0 %v252, 8
        %v456 = vpop.permute.xlu0 %455
        %457 = vrot.lane.b32.xlu0 %v253, 8
        %v458 = vpop.permute.xlu0 %457
        %459 = vrot.lane.b32.xlu0 %v254, 8
        %v460 = vpop.permute.xlu0 %459
        %461 = vrot.lane.b32.xlu0 %v255, 8
        %v462 = vpop.permute.xlu0 %461
        %463 = vrot.lane.b32.xlu0 %v256, 8
        %v464 = vpop.permute.xlu0 %463
        %465 = vrot.lane.b32.xlu0 %v257, 8
        %v466 = vpop.permute.xlu0 %465
        %467 = vrot.lane.b32.xlu0 %v258, 8
        %v468 = vpop.permute.xlu0 %467
        %469 = vrot.lane.b32.xlu0 %v259, 8
        %v470 = vpop.permute.xlu0 %469
        %471 = vrot.lane.b32.xlu0 %v260, 8
        %v472 = vpop.permute.xlu0 %471
        %473 = vrot.lane.b32.xlu0 %v261, 8
        %v474 = vpop.permute.xlu0 %473
        %475 = vrot.lane.b32.xlu0 %v262, 8
        %v476 = vpop.permute.xlu0 %475
        %509 = vrot.lane.b32.xlu0 %v266, 12
        %v510 = vpop.permute.xlu0 %509
        %511 = vrot.lane.b32.xlu0 %v267, 12
        %v512 = vpop.permute.xlu0 %511
        %513 = vrot.lane.b32.xlu0 %v268, 12
        %v514 = vpop.permute.xlu0 %513
        %515 = vrot.lane.b32.xlu0 %v269, 12
        %v516 = vpop.permute.xlu0 %515
        %517 = vrot.lane.b32.xlu0 %v270, 12
        %v518 = vpop.permute.xlu0 %517
        %519 = vrot.lane.b32.xlu0 %v271, 12
        %v520 = vpop.permute.xlu0 %519
        %521 = vrot.lane.b32.xlu0 %v272, 12
        %v522 = vpop.permute.xlu0 %521
        %523 = vrot.lane.b32.xlu0 %v273, 12
        %v524 = vpop.permute.xlu0 %523
        %525 = vrot.lane.b32.xlu0 %v274, 12
        %v526 = vpop.permute.xlu0 %525
        %527 = vrot.lane.b32.xlu0 %v275, 12
        %v528 = vpop.permute.xlu0 %527
        %529 = vrot.lane.b32.xlu0 %v276, 12
        %v530 = vpop.permute.xlu0 %529
        %531 = vrot.lane.b32.xlu0 %v277, 12
        %v532 = vpop.permute.xlu0 %531
        %533 = vrot.lane.b32.xlu0 %v278, 12
        %v534 = vpop.permute.xlu0 %533
        %535 = vrot.lane.b32.xlu0 %v279, 12
        %v536 = vpop.permute.xlu0 %535
        %537 = vrot.lane.b32.xlu0 %v280, 12
        %v538 = vpop.permute.xlu0 %537
        %539 = vrot.lane.b32.xlu0 %v281, 12
        %v540 = vpop.permute.xlu0 %539
        %573 = vrot.lane.b32.xlu0 %v282, 16
        %v574 = vpop.permute.xlu0 %573
        %575 = vrot.lane.b32.xlu0 %v283, 16
        %v576 = vpop.permute.xlu0 %575
        %577 = vrot.lane.b32.xlu0 %v284, 16
        %v578 = vpop.permute.xlu0 %577
        %579 = vrot.lane.b32.xlu0 %v285, 16
        %v580 = vpop.permute.xlu0 %579
        %581 = vrot.lane.b32.xlu0 %v286, 16
        %v582 = vpop.permute.xlu0 %581
        %583 = vrot.lane.b32.xlu0 %v287, 16
        %v584 = vpop.permute.xlu0 %583
        %585 = vrot.lane.b32.xlu0 %v288, 16
        %v586 = vpop.permute.xlu0 %585
        %587 = vrot.lane.b32.xlu0 %v289, 16
        %v588 = vpop.permute.xlu0 %587
        %589 = vrot.lane.b32.xlu0 %v290, 16
        %v590 = vpop.permute.xlu0 %589
        %591 = vrot.lane.b32.xlu0 %v291, 16
        %v592 = vpop.permute.xlu0 %591
        %593 = vrot.lane.b32.xlu0 %v292, 16
        %v594 = vpop.permute.xlu0 %593
        %595 = vrot.lane.b32.xlu0 %v293, 16
        %v596 = vpop.permute.xlu0 %595
        %597 = vrot.lane.b32.xlu0 %v294, 16
        %v598 = vpop.permute.xlu0 %597
        %599 = vrot.lane.b32.xlu0 %v295, 16
        %v600 = vpop.permute.xlu0 %599
        %601 = vrot.lane.b32.xlu0 %v296, 16
        %v602 = vpop.permute.xlu0 %601
        %603 = vrot.lane.b32.xlu0 %v297, 16
        %v604 = vpop.permute.xlu0 %603
        %637 = vrot.lane.b32.xlu0 %v298, 20
        %v638 = vpop.permute.xlu0 %637
        %639 = vrot.lane.b32.xlu0 %v299, 20
        %v640 = vpop.permute.xlu0 %639
        %641 = vrot.lane.b32.xlu0 %v300, 20
        %v642 = vpop.permute.xlu0 %641
        %643 = vrot.lane.b32.xlu0 %v301, 20
        %v644 = vpop.permute.xlu0 %643
        %645 = vrot.lane.b32.xlu0 %v302, 20
        %v646 = vpop.permute.xlu0 %645
        %647 = vrot.lane.b32.xlu0 %v303, 20
        %v648 = vpop.permute.xlu0 %647
        %649 = vrot.lane.b32.xlu0 %v304, 20
        %v650 = vpop.permute.xlu0 %649
        %651 = vrot.lane.b32.xlu0 %v305, 20
        %v652 = vpop.permute.xlu0 %651
        %653 = vrot.lane.b32.xlu0 %v306, 20
        %v654 = vpop.permute.xlu0 %653
        %655 = vrot.lane.b32.xlu0 %v307, 20
        %v656 = vpop.permute.xlu0 %655
        %657 = vrot.lane.b32.xlu0 %v308, 20
        %v658 = vpop.permute.xlu0 %657
        %659 = vrot.lane.b32.xlu0 %v309, 20
        %v660 = vpop.permute.xlu0 %659
        %661 = vrot.lane.b32.xlu0 %v310, 20
        %v662 = vpop.permute.xlu0 %661
        %663 = vrot.lane.b32.xlu0 %v311, 20
        %v664 = vpop.permute.xlu0 %663
        %665 = vrot.lane.b32.xlu0 %v312, 20
        %v666 = vpop.permute.xlu0 %665
        %667 = vrot.lane.b32.xlu0 %v313, 20
        %v668 = vpop.permute.xlu0 %667
        %701 = vrot.lane.b32.xlu0 %v317, 24
        %v702 = vpop.permute.xlu0 %701
        %703 = vrot.lane.b32.xlu0 %v318, 24
        %v704 = vpop.permute.xlu0 %703
        %705 = vrot.lane.b32.xlu0 %v319, 24
        %v706 = vpop.permute.xlu0 %705
        %707 = vrot.lane.b32.xlu0 %v320, 24
        %v708 = vpop.permute.xlu0 %707
        %709 = vrot.lane.b32.xlu0 %v321, 24
        %v710 = vpop.permute.xlu0 %709
        %711 = vrot.lane.b32.xlu0 %v322, 24
        %v712 = vpop.permute.xlu0 %711
        %713 = vrot.lane.b32.xlu0 %v323, 24
        %v714 = vpop.permute.xlu0 %713
        %715 = vrot.lane.b32.xlu0 %v324, 24
        %v716 = vpop.permute.xlu0 %715
        %717 = vrot.lane.b32.xlu0 %v325, 24
        %v718 = vpop.permute.xlu0 %717
        %719 = vrot.lane.b32.xlu0 %v326, 24
        %v720 = vpop.permute.xlu0 %719
        %721 = vrot.lane.b32.xlu0 %v327, 24
        %v722 = vpop.permute.xlu0 %721
        %723 = vrot.lane.b32.xlu0 %v328, 24
        %v724 = vpop.permute.xlu0 %723
        %725 = vrot.lane.b32.xlu0 %v329, 24
        %v726 = vpop.permute.xlu0 %725
        %727 = vrot.lane.b32.xlu0 %v330, 24
        %v728 = vpop.permute.xlu0 %727
        %729 = vrot.lane.b32.xlu0 %v331, 24
        %v730 = vpop.permute.xlu0 %729
        %731 = vrot.lane.b32.xlu0 %v332, 24
        %v732 = vpop.permute.xlu0 %731
        %765 = vrot.lane.b32.xlu0 %v333, 28
        %v766 = vpop.permute.xlu0 %765
        %767 = vrot.lane.b32.xlu0 %v334, 28
        %v768 = vpop.permute.xlu0 %767
        %769 = vrot.lane.b32.xlu0 %v335, 28
        %v770 = vpop.permute.xlu0 %769
        %771 = vrot.lane.b32.xlu0 %v336, 28
        %v772 = vpop.permute.xlu0 %771
        %773 = vrot.lane.b32.xlu0 %v337, 28
        %v774 = vpop.permute.xlu0 %773
        %775 = vrot.lane.b32.xlu0 %v338, 28
        %v776 = vpop.permute.xlu0 %775
        %777 = vrot.lane.b32.xlu0 %v339, 28
        %v778 = vpop.permute.xlu0 %777
        %779 = vrot.lane.b32.xlu0 %v340, 28
        %v780 = vpop.permute.xlu0 %779
        %781 = vrot.lane.b32.xlu0 %v341, 28
        %v782 = vpop.permute.xlu0 %781
        %783 = vrot.lane.b32.xlu0 %v342, 28
        %v784 = vpop.permute.xlu0 %783
        %785 = vrot.lane.b32.xlu0 %v343, 28
        %v786 = vpop.permute.xlu0 %785
        %787 = vrot.lane.b32.xlu0 %v344, 28
        %v788 = vpop.permute.xlu0 %787
        %789 = vrot.lane.b32.xlu0 %v345, 28
        %v790 = vpop.permute.xlu0 %789
        %791 = vrot.lane.b32.xlu0 %v346, 28
        %v792 = vpop.permute.xlu0 %791
        %793 = vrot.lane.b32.xlu0 %v347, 28
        %v794 = vpop.permute.xlu0 %793
        %795 = vrot.lane.b32.xlu0 %v348, 28
        %v796 = vpop.permute.xlu0 %795
        %829 = vrot.lane.b32.xlu0 %v349, 32
        %v830 = vpop.permute.xlu0 %829
        %831 = vrot.lane.b32.xlu0 %v350, 32
        %v832 = vpop.permute.xlu0 %831
        %833 = vrot.lane.b32.xlu0 %v351, 32
        %v834 = vpop.permute.xlu0 %833
        %835 = vrot.lane.b32.xlu0 %v352, 32
        %v836 = vpop.permute.xlu0 %835
        %837 = vrot.lane.b32.xlu0 %v353, 32
        %v838 = vpop.permute.xlu0 %837
        %839 = vrot.lane.b32.xlu0 %v354, 32
        %v840 = vpop.permute.xlu0 %839
        %841 = vrot.lane.b32.xlu0 %v355, 32
        %v842 = vpop.permute.xlu0 %841
        %843 = vrot.lane.b32.xlu0 %v356, 32
        %v844 = vpop.permute.xlu0 %843
        %845 = vrot.lane.b32.xlu0 %v357, 32
        %v846 = vpop.permute.xlu0 %845
        %847 = vrot.lane.b32.xlu0 %v358, 32
        %v848 = vpop.permute.xlu0 %847
        %849 = vrot.lane.b32.xlu0 %v359, 32
        %v850 = vpop.permute.xlu0 %849
        %851 = vrot.lane.b32.xlu0 %v360, 32
        %v852 = vpop.permute.xlu0 %851
        %853 = vrot.lane.b32.xlu0 %v361, 32
        %v854 = vpop.permute.xlu0 %853
        %855 = vrot.lane.b32.xlu0 %v362, 32
        %v856 = vpop.permute.xlu0 %855
        %857 = vrot.lane.b32.xlu0 %v363, 32
        %v858 = vpop.permute.xlu0 %857
        %859 = vrot.lane.b32.xlu0 %v364, 32
        %v860 = vpop.permute.xlu0 %859
        %vm877 = vcmask 31744
        %v878 = vsel %vm877, %v215, %v382
        %v879 = vsel %vm877, %v216, %v384
        %v880 = vsel %vm877, %v217, %v386
        %v881 = vsel %vm877, %v218, %v388
        %v882 = vsel %vm877, %v219, %v390
        %v883 = vsel %vm877, %v220, %v392
        %v884 = vsel %vm877, %v221, %v394
        %v885 = vsel %vm877, %v222, %v396
        %v886 = vsel %vm877, %v223, %v398
        %v887 = vsel %vm877, %v224, %v400
        %v888 = vsel %vm877, %v225, %v402
        %v889 = vsel %vm877, %v226, %v404
        %v890 = vsel %vm877, %v227, %v406
        %v891 = vsel %vm877, %v228, %v408
        %v892 = vsel %vm877, %v229, %v410
        %v893 = vsel %vm877, %v230, %v412
        %vm894 = vcmask 64512
        %v895 = vsel %vm894, %v878, %v446
        %v896 = vsel %vm894, %v879, %v448
        %v897 = vsel %vm894, %v880, %v450
        %v898 = vsel %vm894, %v881, %v452
        %v899 = vsel %vm894, %v882, %v454
        %v900 = vsel %vm894, %v883, %v456
        %v901 = vsel %vm894, %v884, %v458
        %v902 = vsel %vm894, %v885, %v460
        %v903 = vsel %vm894, %v886, %v462
        %v904 = vsel %vm894, %v887, %v464
        %v905 = vsel %vm894, %v888, %v466
        %v906 = vsel %vm894, %v889, %v468
        %v907 = vsel %vm894, %v890, %v470
        %v908 = vsel %vm894, %v891, %v472
        %v909 = vsel %vm894, %v892, %v474
        %v910 = vsel %vm894, %v893, %v476
        %vm911 = vcmask 97280
        %v912 = vsel %vm911, %v895, %v510
        %v913 = vsel %vm911, %v896, %v512
        %v914 = vsel %vm911, %v897, %v514
        %v915 = vsel %vm911, %v898, %v516
        %v916 = vsel %vm911, %v899, %v518
        %v917 = vsel %vm911, %v900, %v520
        %v918 = vsel %vm911, %v901, %v522
        %v919 = vsel %vm911, %v902, %v524
        %v920 = vsel %vm911, %v903, %v526
        %v921 = vsel %vm911, %v904, %v528
        %v922 = vsel %vm911, %v905, %v530
        %v923 = vsel %vm911, %v906, %v532
        %v924 = vsel %vm911, %v907, %v534
        %v925 = vsel %vm911, %v908, %v536
        %v926 = vsel %vm911, %v909, %v538
        %v927 = vsel %vm911, %v910, %v540
        %vm928 = vcmask 130048
        %v929 = vsel %vm928, %v912, %v574
        %v930 = vsel %vm928, %v913, %v576
        %v931 = vsel %vm928, %v914, %v578
        %v932 = vsel %vm928, %v915, %v580
        %v933 = vsel %vm928, %v916, %v582
        %v934 = vsel %vm928, %v917, %v584
        %v935 = vsel %vm928, %v918, %v586
        %v936 = vsel %vm928, %v919, %v588
        %v937 = vsel %vm928, %v920, %v590
        %v938 = vsel %vm928, %v921, %v592
        %v939 = vsel %vm928, %v922, %v594
        %v940 = vsel %vm928, %v923, %v596
        %v941 = vsel %vm928, %v924, %v598
        %v942 = vsel %vm928, %v925, %v600
        %v943 = vsel %vm928, %v926, %v602
        %v944 = vsel %vm928, %v927, %v604
        %vm945 = vcmask 162816
        %v946 = vsel %vm945, %v929, %v638
        %v947 = vsel %vm945, %v930, %v640
        %v948 = vsel %vm945, %v931, %v642
        %v949 = vsel %vm945, %v932, %v644
        %v950 = vsel %vm945, %v933, %v646
        %v951 = vsel %vm945, %v934, %v648
        %v952 = vsel %vm945, %v935, %v650
        %v953 = vsel %vm945, %v936, %v652
        %v954 = vsel %vm945, %v937, %v654
        %v955 = vsel %vm945, %v938, %v656
        %v956 = vsel %vm945, %v939, %v658
        %v957 = vsel %vm945, %v940, %v660
        %v958 = vsel %vm945, %v941, %v662
        %v959 = vsel %vm945, %v942, %v664
        %v960 = vsel %vm945, %v943, %v666
        %v961 = vsel %vm945, %v944, %v668
        %vm962 = vcmask 195584
        %v963 = vsel %vm962, %v946, %v702
        %v964 = vsel %vm962, %v947, %v704
        %v965 = vsel %vm962, %v948, %v706
        %v966 = vsel %vm962, %v949, %v708
        %v967 = vsel %vm962, %v950, %v710
        %v968 = vsel %vm962, %v951, %v712
        %v969 = vsel %vm962, %v952, %v714
        %v970 = vsel %vm962, %v953, %v716
        %v971 = vsel %vm962, %v954, %v718
        %v972 = vsel %vm962, %v955, %v720
        %v973 = vsel %vm962, %v956, %v722
        %v974 = vsel %vm962, %v957, %v724
        %v975 = vsel %vm962, %v958, %v726
        %v976 = vsel %vm962, %v959, %v728
        %v977 = vsel %vm962, %v960, %v730
        %v978 = vsel %vm962, %v961, %v732
        %vm979 = vcmask 228352
        %v980 = vsel %vm979, %v963, %v766
        %v981 = vsel %vm979, %v964, %v768
        %v982 = vsel %vm979, %v965, %v770
        %v983 = vsel %vm979, %v966, %v772
        %v984 = vsel %vm979, %v967, %v774
        %v985 = vsel %vm979, %v968, %v776
        %v986 = vsel %vm979, %v969, %v778
        %v987 = vsel %vm979, %v970, %v780
        %v988 = vsel %vm979, %v971, %v782
        %v989 = vsel %vm979, %v972, %v784
        %v990 = vsel %vm979, %v973, %v786
        %v991 = vsel %vm979, %v974, %v788
        %v992 = vsel %vm979, %v975, %v790
        %v993 = vsel %vm979, %v976, %v792
        %v994 = vsel %vm979, %v977, %v794
        %v995 = vsel %vm979, %v978, %v796
        %vm996 = vcmask 261120
        %v997 = vsel %vm996, %v980, %v830
        %v998 = vsel %vm996, %v981, %v832
        %v999 = vsel %vm996, %v982, %v834
        %v1000 = vsel %vm996, %v983, %v836
        %v1001 = vsel %vm996, %v984, %v838
        %v1002 = vsel %vm996, %v985, %v840
        %v1003 = vsel %vm996, %v986, %v842
        %v1004 = vsel %vm996, %v987, %v844
        %v1005 = vsel %vm996, %v988, %v846
        %v1006 = vsel %vm996, %v989, %v848
        %v1007 = vsel %vm996, %v990, %v850
        %v1008 = vsel %vm996, %v991, %v852
        %v1009 = vsel %vm996, %v992, %v854
        %v1010 = vsel %vm996, %v993, %v856
        %v1011 = vsel %vm996, %v994, %v858
        %v1012 = vsel %vm996, %v995, %v860
        %v1013 = vpack.c.bf16 %v998, %v997
        %v1014 = vpack.c.bf16 %v1000, %v999
        %v1015 = vpack.c.bf16 %v1002, %v1001
        %v1016 = vpack.c.bf16 %v1004, %v1003
        %v1017 = vpack.c.bf16 %v1006, %v1005
        %v1018 = vpack.c.bf16 %v1008, %v1007
        %v1019 = vpack.c.bf16 %v1010, %v1009
        %v1020 = vpack.c.bf16 %v1012, %v1011
        %v1021 = vld [vmem:[%s1] sm:$0xf]
        %v1022 = vld [vmem:[%s1 + $0x4] sm:$0xf]
        %v1023 = vld [vmem:[%s1 + $0x8] sm:$0xf]
        %v1024 = vld [vmem:[%s1 + $0xc] sm:$0xf]
        %v1025 = vld [vmem:[%s1 + $0x10] sm:$0x3]
        %v1031 = vunpack.c.l.b16 %v1021
        %v1032 = vunpack.c.l.b16 %v1022
        %v1033 = vunpack.c.l.b16 %v1023
        %v1034 = vunpack.c.l.b16 %v1024
        %v1035 = vunpack.c.l.b16 %v1025
        %v1036 = vpack.c.b16 %v1032, %v1031
        %v1037 = vpack.c.b16 %v1034, %v1033
        %v1038 = vpack.c.b16 %v1035, %v1035
        %vm1041 = vcmask 293888
        %v1043 = vsel %vm1041, %v1013, 0
        %v1046 = vsel %vm1041, %v1014, 0
        %v1049 = vsel %vm1041, %v1015, 0
        %v1052 = vsel %vm1041, %v1016, 0
        %v1055 = vsel %vm1041, %v1017, 0
        %v1058 = vsel %vm1041, %v1018, 0
        %v1061 = vsel %vm1041, %v1019, 0
        %v1064 = vsel %vm1041, %v1020, 0
        %vm1066 = vcmask 1041408
        %v1068 = vsel %vm1066, %v1038, 0
        %1070 = vmatpush.bf16.msra.mxu0 0
        %1071 = vmatpush.bf16.msra.mxu0 0
        %1072 = vmatpush.bf16.msra.mxu0 0
        %1073 = vmatpush.bf16.msra.mxu0 0
        %1074 = vmatpush.bf16.msra.mxu0 0
        %1075 = vmatpush.bf16.msra.mxu0 %v1068
        %1076 = vmatpush.bf16.msra.mxu0 %v1037
        %1077 = vmatpush.bf16.msra.mxu0 %v1036
        %1078 = vmatmul.bf16.gmra.mxu0 %v1043
        %v1079 = vpop.f32.mrf.mxu0
        %v1080 = vadd.f32 0.0, %v1079
        %v1081 = vpop.f32.mrf.mxu0
        %v1082 = vadd.f32 0.0, %v1081
        %1083 = vmatmul.bf16.gmra.mxu0 %v1046
        %v1084 = vpop.f32.mrf.mxu0
        %v1085 = vadd.f32 0.0, %v1084
        %v1086 = vpop.f32.mrf.mxu0
        %v1087 = vadd.f32 0.0, %v1086
        %1088 = vmatmul.bf16.gmra.mxu0 %v1049
        %v1089 = vpop.f32.mrf.mxu0
        %v1090 = vadd.f32 0.0, %v1089
        %v1091 = vpop.f32.mrf.mxu0
        %v1092 = vadd.f32 0.0, %v1091
        %1093 = vmatmul.bf16.gmra.mxu0 %v1052
        %v1094 = vpop.f32.mrf.mxu0
        %v1095 = vadd.f32 0.0, %v1094
        %v1096 = vpop.f32.mrf.mxu0
        %v1097 = vadd.f32 0.0, %v1096
        %1098 = vmatmul.bf16.gmra.mxu0 %v1055
        %v1099 = vpop.f32.mrf.mxu0
        %v1100 = vadd.f32 0.0, %v1099
        %v1101 = vpop.f32.mrf.mxu0
        %v1102 = vadd.f32 0.0, %v1101
        %1103 = vmatmul.bf16.gmra.mxu0 %v1058
        %v1104 = vpop.f32.mrf.mxu0
        %v1105 = vadd.f32 0.0, %v1104
        %v1106 = vpop.f32.mrf.mxu0
        %v1107 = vadd.f32 0.0, %v1106
        %1108 = vmatmul.bf16.gmra.mxu0 %v1061
        %v1109 = vpop.f32.mrf.mxu0
        %v1110 = vadd.f32 0.0, %v1109
        %v1111 = vpop.f32.mrf.mxu0
        %v1112 = vadd.f32 0.0, %v1111
        %1113 = vmatmul.bf16.gmra.mxu0 %v1064
        %v1114 = vpop.f32.mrf.mxu0
        %v1115 = vadd.f32 0.0, %v1114
        %v1116 = vpop.f32.mrf.mxu0
        %v1117 = vadd.f32 0.0, %v1116
        %1118 = vdwg.mxu0
        %v1119 = vld [vmem:[%s2] sm:$0x1]
        %v1121 = vperm.slane %v1119, 0
        %v1123 = vmul.f32 %v1080, %v1121
        %v1124 = vmul.f32 %v1082, %v1121
        %v1125 = vmul.f32 %v1085, %v1121
        %v1126 = vmul.f32 %v1087, %v1121
        %v1127 = vmul.f32 %v1090, %v1121
        %v1128 = vmul.f32 %v1092, %v1121
        %v1129 = vmul.f32 %v1095, %v1121
        %v1130 = vmul.f32 %v1097, %v1121
        %v1131 = vmul.f32 %v1100, %v1121
        %v1132 = vmul.f32 %v1102, %v1121
        %v1133 = vmul.f32 %v1105, %v1121
        %v1134 = vmul.f32 %v1107, %v1121
        %v1135 = vmul.f32 %v1110, %v1121
        %v1136 = vmul.f32 %v1112, %v1121
        %v1137 = vmul.f32 %v1115, %v1121
        %v1138 = vmul.f32 %v1117, %v1121
        %v1139 = vld [vmem:[%s3] sm:$0x1]
        %v1141 = vperm.slane %v1139, 0
        %v1143 = vadd.f32 %v1123, %v1141
        %v1144 = vadd.f32 %v1124, %v1141
        %v1145 = vadd.f32 %v1125, %v1141
        %v1146 = vadd.f32 %v1126, %v1141
        %v1147 = vadd.f32 %v1127, %v1141
        %v1148 = vadd.f32 %v1128, %v1141
        %v1149 = vadd.f32 %v1129, %v1141
        %v1150 = vadd.f32 %v1130, %v1141
        %v1151 = vadd.f32 %v1131, %v1141
        %v1152 = vadd.f32 %v1132, %v1141
        %v1153 = vadd.f32 %v1133, %v1141
        %v1154 = vadd.f32 %v1134, %v1141
        %v1155 = vadd.f32 %v1135, %v1141
        %v1156 = vadd.f32 %v1136, %v1141
        %v1157 = vadd.f32 %v1137, %v1141
        %v1158 = vadd.f32 %v1138, %v1141
        %v1159 = vmax.f32 %v1143, 0.0
        %v1160 = vmax.f32 %v1144, 0.0
        %v1161 = vmax.f32 %v1145, 0.0
        %v1162 = vmax.f32 %v1146, 0.0
        %v1163 = vmax.f32 %v1147, 0.0
        %v1164 = vmax.f32 %v1148, 0.0
        %v1165 = vmax.f32 %v1149, 0.0
        %v1166 = vmax.f32 %v1150, 0.0
        %v1167 = vmax.f32 %v1151, 0.0
        %v1168 = vmax.f32 %v1152, 0.0
        %v1169 = vmax.f32 %v1153, 0.0
        %v1170 = vmax.f32 %v1154, 0.0
        %v1171 = vmax.f32 %v1155, 0.0
        %v1172 = vmax.f32 %v1156, 0.0
        %v1173 = vmax.f32 %v1157, 0.0
        %v1174 = vmax.f32 %v1158, 0.0
        %1175 = vst [vmem:[%s204] sm:$0xff] %v1159
        %1176 = vst [vmem:[%s204 + $0x8] sm:$0xff] %v1160
        %1177 = vst [vmem:[%s204 + $0x10] sm:$0xff] %v1161
        %1178 = vst [vmem:[%s204 + $0x18] sm:$0xff] %v1162
        %1179 = vst [vmem:[%s204 + $0x20] sm:$0xff] %v1163
        %1180 = vst [vmem:[%s204 + $0x28] sm:$0xff] %v1164
        %1181 = vst [vmem:[%s204 + $0x30] sm:$0xff] %v1165
        %1182 = vst [vmem:[%s204 + $0x38] sm:$0xff] %v1166
        %1183 = vst [vmem:[%s204 + $0x40] sm:$0xff] %v1167
        %1184 = vst [vmem:[%s204 + $0x48] sm:$0xff] %v1168
        %1185 = vst [vmem:[%s204 + $0x50] sm:$0xff] %v1169
        %1186 = vst [vmem:[%s204 + $0x58] sm:$0xff] %v1170
        %1187 = vst [vmem:[%s204 + $0x60] sm:$0xff] %v1171
        %1188 = vst [vmem:[%s204 + $0x68] sm:$0xff] %v1172
        %1189 = vst [vmem:[%s204 + $0x70] sm:$0xff] %v1173
        %1190 = vst [vmem:[%s204 + $0x78] sm:$0xff] %v1174
        %s1191 = sand.u32 %s129, 1
        %s1192 = scalar_lea.sflag [#allocation3], %s1191
        %s1193 = sand.u32 %s129, 1
        %s1194 = smul.addr %s1193, 128
        %s1195 = scalar_lea.vmem [#allocation2], %s1194
        // Predicated region
        $region37: #{tpu_custom_call.1} parent=35 // pred_check
          %p1196 = pneg %p139
        $region38: #{tpu_custom_call.1} parent=35 // pred_check_branch
          %1198 = sbr.rel (%p1196) target = $region40
        $region39: #{tpu_custom_call.1} parent=35 // pred_region
          %s1199 = smul.u32 16, %s23
          %1201 = vsyncadd %s1192, 0
          %s1202 = smul.addr %s22, 32
          %s1203 = sadd.s32 %s1199, %s1202
          %s1204 = smul.addr %s1203, 8
          %s1205 = scalar_lea.hbm %s4, %s1204
          %s1206 = sshll.u32 %s1195, 4
          %s1207 = int_to_ptr.vmem [resolvable:$true] %s1206
          %s1208 = sshll.u32 %s1205, 4
          %s1209 = int_to_ptr.hbm [resolvable:$true] %s1208
          %1214 = dma.vmem_to_hbm [thread:$0]  %s1207, 2048, %s1209, %s1192, 128, 128, 8
        $region40: #{tpu_custom_call.1} parent=35 // pred_fallthru
          _
      $region36: #{tpu_custom_call.1} parent=5 // pred_fallthru
        _
      %p1215 = scmp.le.s32.totalorder 2, %s13
      // Predicated region
      $region41: #{tpu_custom_call.1} parent=5 // pred_check
        %p1216 = pneg %p1215
      $region42: #{tpu_custom_call.1} parent=5 // pred_check_branch
        %1218 = sbr.rel (%p1216) target = $region44
      $region43: #{tpu_custom_call.1} parent=5 // pred_region
        %s1219 = ssub.s32 %s13, 2
        // Predicated region
        $region45: #{tpu_custom_call.1} parent=43 // pred_check
          %p1220 = pneg %p145
        $region46: #{tpu_custom_call.1} parent=43 // pred_check_branch
          %1222 = sbr.rel (%p1220) target = $region48
        $region47: #{tpu_custom_call.1} parent=43 // pred_region
          %s1223 = sand.u32 %s130, 1
          %s1224 = scalar_lea.sflag [#allocation3], %s1223
          %s1225 = sand.u32 %s130, 1
          %s1226 = smul.addr %s1225, 128
          %s1227 = scalar_lea.vmem [#allocation2], %s1226
          %1229 = dma.done %s1224, 2048
        $region48: #{tpu_custom_call.1} parent=43 // pred_fallthru
          _
      $region44: #{tpu_custom_call.1} parent=5 // pred_fallthru
        _
    $region6: #{tpu_custom_call.1} parent=1 // loop_footer
      %s17 = sadd.s32 1, %s13
    $region7: #{tpu_custom_call.1} parent=1 // loop_footer_branch
      %12 = sbr.rel target = $region3
    $region8: #{tpu_custom_call.1} parent=1 // loop_exit
      _
    %1230 = vsyncpa [#allocation3], 1
    %s1231 = scalar_lea.sflag [#allocation3], 1
    %1232 = vsyncpa %s1231, 1

</llo_original>
